<compile_context>
chip_gen: v7x
topology: tpu7x:2x2x1
jax: 0.10.0
libtpu: 0.0.40
codegen_flags: <defaults>
</compile_context>

<pallas_src>
import jax
import jax.numpy as jnp
from jax.experimental import pallas as pl
from jax.experimental.pallas import tpu as pltpu

BN_EPS = 1e-5


def _round_up(x, m):
    return (x + m - 1) // m * m


def _sublane_align(dtype):
    # Sub-32-bit dtypes pack along sublanes: f32 -> 8, bf16 -> 16, int8/fp8 -> 32.
    return max(8, 32 // jnp.dtype(dtype).itemsize)


# ---- Pass 1: stats only. Per-tile partial per-feature sum / sum-of-squares ----
def stats_kernel(x_ref, wt_ref, sum_ref, sumsq_ref):
    # (tm, D_in) @ (D_in, D_out) with f32 accumulation on the MXU.
    h = jnp.dot(x_ref[...], wt_ref[...], preferred_element_type=jnp.float32)
    sum_ref[...] = jnp.sum(h, axis=0, keepdims=True)
    sumsq_ref[...] = jnp.sum(h * h, axis=0, keepdims=True)


# ---- Pass 2: recompute matmul, fused BN affine (h*scale + shift) + residual ---
def fused_bn_residual_kernel(x_ref, wt_ref, scale_ref, shift_ref, o_ref):
    h = jnp.dot(x_ref[...], wt_ref[...], preferred_element_type=jnp.float32)
    y = h * scale_ref[...] + shift_ref[...]
    o_ref[...] = (x_ref[...].astype(jnp.float32) + y).astype(o_ref.dtype)


def levit_residual_mlp_bn(hidden_state, weight, gamma, beta, *, row_tile=1024):
    """hidden_state: (B, S, D); weight: (D, D) in nn.Linear layout (out, in);
    gamma, beta: (D,). Returns hidden_state + BN(hidden_state @ W.T)."""
    B, S, D_in = hidden_state.shape
    D_out = weight.shape[0]
    assert weight.shape == (D_out, D_in)
    assert D_out == D_in, "residual connection requires matching feature dims"
    # TODO(synk): training-time stochastic depth (drop_rate > 0) per-sample mask
    # is not implemented; this is the eval / drop_rate == 0 forward path.

    N = B * S
    x_flat = hidden_state.reshape(N, D_in)

    # Dtype-aware row tiling (sublane packing); pad with zero rows.  Zero rows
    # add nothing to sum / sum-of-squares and we divide by the true N.
    sub = _sublane_align(x_flat.dtype)
    tm = _round_up(min(row_tile, _round_up(N, sub)), sub)
    N_pad = _round_up(N, tm)
    if N_pad != N:
        x_flat = jnp.pad(x_flat, ((0, N_pad - N), (0, 0)))
    num_tiles = N_pad // tm

    # Pre-transpose the weight once in the wrapper -> MXU fed directly.
    w_t = jnp.asarray(weight).T  # (D_in, D_out)

    x_item = jnp.dtype(x_flat.dtype).itemsize
    w_item = jnp.dtype(w_t.dtype).itemsize
    out_item = jnp.dtype(hidden_state.dtype).itemsize

    # Explicit VMEM budget only if the tile footprint outgrows the smallest
    # default scoped limit (16 MiB on v5e); cap at 64 MiB for v7x.
    vmem_est = (2 * tm * D_in * x_item            # x tile, double-buffered
                + 2 * D_in * D_out * w_item        # resident weight (conservative x2)
                + 2 * tm * D_out * max(out_item, 4)  # out tile / f32 matmul result
                + 8 * D_out * 4                    # partial stats / scale / shift
                + (1 << 20))                       # headroom
    vmem_bytes = int(min(vmem_est, 64 << 20)) if vmem_est > (16 << 20) else None

    cost1 = pl.CostEstimate(
        flops=2 * N_pad * D_in * D_out,
        transcendentals=0,
        bytes_accessed=(N_pad * D_in * x_item + D_in * D_out * w_item
                        + 2 * num_tiles * D_out * 4),
    )
    cost2 = pl.CostEstimate(
        flops=2 * N_pad * D_in * D_out + 3 * N_pad * D_out,
        transcendentals=0,
        bytes_accessed=(N_pad * D_in * x_item + D_in * D_out * w_item
                        + 2 * D_out * 4 + N_pad * D_out * out_item),
    )

    # ---- Pass 1: per-tile partial stats (fully parallel -> v7x megacore). ----
    part_sum, part_sumsq = pl.pallas_call(
        stats_kernel,
        out_shape=(
            jax.ShapeDtypeStruct((num_tiles, 1, D_out), jnp.float32),
            jax.ShapeDtypeStruct((num_tiles, 1, D_out), jnp.float32),
        ),
        grid=(num_tiles,),
        in_specs=[
            pl.BlockSpec((tm, D_in), lambda i: (i, 0)),
            pl.BlockSpec((D_in, D_out), lambda i: (0, 0)),   # W stays resident
        ],
        out_specs=(
            pl.BlockSpec((None, 1, D_out), lambda i: (i, 0, 0)),
            pl.BlockSpec((None, 1, D_out), lambda i: (i, 0, 0)),
        ),
        compiler_params=pltpu.CompilerParams(
            dimension_semantics=("parallel",),
            vmem_limit_bytes=vmem_bytes),
        cost_estimate=cost1,
    )(x_flat, w_t)

    # Tiny finalization in plain JAX: reduce partials, fused BN scale/shift.
    h_sum = jnp.sum(part_sum, axis=0)      # (1, D_out)
    h_sumsq = jnp.sum(part_sumsq, axis=0)  # (1, D_out)
    n = jnp.float32(N)
    mean = h_sum / n
    # NOTE: E[h^2] - E[h]^2 in f32, clamped at 0; adequate for LeViT-scale
    # activations (reference uses the centered two-pass form).
    var = jnp.maximum(h_sumsq / n - mean * mean, 0.0)
    inv_std = jax.lax.rsqrt(var + BN_EPS)
    scale = gamma.reshape(1, D_out).astype(jnp.float32) * inv_std
    shift = beta.reshape(1, D_out).astype(jnp.float32) - mean * scale

    # ---- Pass 2: recomputed matmul + BN affine + residual, fully parallel. ----
    out_flat = pl.pallas_call(
        fused_bn_residual_kernel,
        out_shape=jax.ShapeDtypeStruct((N_pad, D_out), hidden_state.dtype),
        grid=(num_tiles,),
        in_specs=[
            pl.BlockSpec((tm, D_in), lambda i: (i, 0)),
            pl.BlockSpec((D_in, D_out), lambda i: (0, 0)),    # W stays resident
            pl.BlockSpec((1, D_out), lambda i: (0, 0)),
            pl.BlockSpec((1, D_out), lambda i: (0, 0)),
        ],
        out_specs=pl.BlockSpec((tm, D_out), lambda i: (i, 0)),
        compiler_params=pltpu.CompilerParams(
            dimension_semantics=("parallel",),
            vmem_limit_bytes=vmem_bytes),
        cost_estimate=cost2,
    )(x_flat, w_t, scale, shift)

    return out_flat[:N].reshape(B, S, D_out)


def reference(hidden_state, weight, gamma, beta):
    # Pure-JAX reference of LevitResidualLayer (eval) wrapping Linear + BN.
    x = hidden_state.astype(jnp.float32)
    h = jnp.einsum("bsd,od->bso", x, weight.astype(jnp.float32))
    B, S, D = h.shape
    hf = h.reshape(B * S, D)
    mean = hf.mean(axis=0, keepdims=True)
    var = ((hf - mean) ** 2).mean(axis=0, keepdims=True)
    y = (hf - mean) / jnp.sqrt(var + BN_EPS) * gamma + beta
    return (x + y.reshape(B, S, D)).astype(hidden_state.dtype)


if __name__ == "__main__":
    B, S, D = 2, 8, 32   # residual requires D_in == D_out

    key = jax.random.PRNGKey(0)
    k_x, k_w = jax.random.split(key, 2)

    hidden_state = jax.random.normal(k_x, (B, S, D), dtype=jnp.float32)
    weight = jax.random.normal(k_w, (D, D), dtype=jnp.float32) * 0.1
    gamma = 1.0 + 0.01 * jnp.arange(D, dtype=jnp.float32)
    beta = 0.001 * jnp.arange(D, dtype=jnp.float32)

    ref = reference(hidden_state, weight, gamma, beta)

    # Multi-tile path: row_tile=8 -> 2 row tiles, exercises the partial-stat
    # reduction across grid steps.
    out_multi = levit_residual_mlp_bn(hidden_state, weight, gamma, beta, row_tile=8)
    out_multi = jax.block_until_ready(out_multi)
    assert out_multi.shape == (B, S, D)
    err_multi = float(jnp.max(jnp.abs(out_multi - ref)))
    assert jnp.allclose(out_multi, ref, atol=1e-4, rtol=1e-4), err_multi

    # Default (single-tile) path.
    out_single = jax.block_until_ready(
        levit_residual_mlp_bn(hidden_state, weight, gamma, beta))
    err_single = float(jnp.max(jnp.abs(out_single - ref)))
    assert jnp.allclose(out_single, ref, atol=1e-4, rtol=1e-4), err_single

    print("KERNEL_OK")
</pallas_src>

<mosaic_0001>
module attributes {stable_mosaic.version = 11 : i64} {
  func.func @stats_kernel(%arg0: i32, %arg1: memref<8x32xf32, #tpu.memory_space<vmem>>, %arg2: memref<32x32xf32, #tpu.memory_space<vmem>>, %arg3: memref<1x1x32xf32, #tpu.memory_space<vmem>>, %arg4: memref<1x1x32xf32, #tpu.memory_space<vmem>>) attributes {dimension_semantics = [#tpu.dimension_semantics<parallel>], iteration_bounds = array<i64: 2>, scalar_prefetch = 0 : i64, scratch_operands = 0 : i64, tpu.core_type = #tpu.core_type<tc>, window_params = [{transform_indices = @transform_0, window_bounds = array<i64: 8, 32>}, {pipeline_mode = #tpu.pipeline_mode<synchronous>, transform_indices = @transform_1, window_bounds = array<i64: 32, 32>}, {transform_indices = @transform_2, window_bounds = array<i64: 1, 1, 32>}, {transform_indices = @transform_3, window_bounds = array<i64: 1, 1, 32>}]} {
    %c0 = arith.constant 0 : index
    %c0_0 = arith.constant 0 : index
    %0 = vector.load %arg1[%c0, %c0_0] : memref<8x32xf32, #tpu.memory_space<vmem>>, vector<8x32xf32>
    %c0_1 = arith.constant 0 : index
    %c0_2 = arith.constant 0 : index
    %1 = vector.load %arg2[%c0_1, %c0_2] : memref<32x32xf32, #tpu.memory_space<vmem>>, vector<32x32xf32>
    %cst = arith.constant dense<0.000000e+00> : vector<8x32xf32>
    %2 = tpu.matmul %0, %1, %cst {dimension_numbers = #tpu.dot_dimension_numbers<[1], [0], [0], [1], [0, 0, 1, 1], [], []>} : vector<8x32xf32>, vector<32x32xf32>, vector<8x32xf32> -> vector<8x32xf32>
    %cst_3 = arith.constant dense<0.000000e+00> : vector<32xf32>
    %3 = vector.multi_reduction <add>, %2, %cst_3 [0] : vector<8x32xf32> to vector<32xf32>
    %4 = vector.shape_cast %3 : vector<32xf32> to vector<1x32xf32>
    %c0_4 = arith.constant 0 : index
    %c0_5 = arith.constant 0 : index
    %c0_6 = arith.constant 0 : index
    %5 = vector.load %arg3[%c0_4, %c0_5, %c0_6] : memref<1x1x32xf32, #tpu.memory_space<vmem>>, vector<1x1x32xf32>
    %6 = vector.shape_cast %5 : vector<1x1x32xf32> to vector<1x32xf32>
    %7 = vector.shape_cast %4 : vector<1x32xf32> to vector<1x1x32xf32>
    tpu.vector_store %arg3[%c0_4, %c0_5, %c0_6], %7 {strides = array<i32>} : memref<1x1x32xf32, #tpu.memory_space<vmem>>, vector<1x1x32xf32>,
    %8 = arith.mulf %2, %2 : vector<8x32xf32>
    %cst_7 = arith.constant dense<0.000000e+00> : vector<32xf32>
    %9 = vector.multi_reduction <add>, %8, %cst_7 [0] : vector<8x32xf32> to vector<32xf32>
    %10 = vector.shape_cast %9 : vector<32xf32> to vector<1x32xf32>
    %c0_8 = arith.constant 0 : index
    %c0_9 = arith.constant 0 : index
    %c0_10 = arith.constant 0 : index
    %11 = vector.load %arg4[%c0_8, %c0_9, %c0_10] : memref<1x1x32xf32, #tpu.memory_space<vmem>>, vector<1x1x32xf32>
    %12 = vector.shape_cast %11 : vector<1x1x32xf32> to vector<1x32xf32>
    %13 = vector.shape_cast %10 : vector<1x32xf32> to vector<1x1x32xf32>
    tpu.vector_store %arg4[%c0_8, %c0_9, %c0_10], %13 {strides = array<i32>} : memref<1x1x32xf32, #tpu.memory_space<vmem>>, vector<1x1x32xf32>,
    return
  }
  func.func @transform_0(%arg0: i32) -> (i32, i32) {
    %c0_i32 = arith.constant 0 : i32
    %c0_i32_0 = arith.constant 0 : i32
    return %arg0, %c0_i32 : i32, i32
  }
  func.func @transform_1(%arg0: i32) -> (i32, i32) {
    %c0_i32 = arith.constant 0 : i32
    %c0_i32_0 = arith.constant 0 : i32
    %c0_i32_1 = arith.constant 0 : i32
    return %c0_i32, %c0_i32_0 : i32, i32
  }
  func.func @transform_2(%arg0: i32) -> (i32, i32, i32) {
    %c0_i32 = arith.constant 0 : i32
    %c0_i32_0 = arith.constant 0 : i32
    %c0_i32_1 = arith.constant 0 : i32
    return %arg0, %c0_i32, %c0_i32_0 : i32, i32, i32
  }
  func.func @transform_3(%arg0: i32) -> (i32, i32, i32) {
    %c0_i32 = arith.constant 0 : i32
    %c0_i32_0 = arith.constant 0 : i32
    %c0_i32_1 = arith.constant 0 : i32
    return %arg0, %c0_i32, %c0_i32_0 : i32, i32, i32
  }
}

</mosaic_0001>

<llo_original>
// kernel: tpu_custom_call.1
$region0: #{tpu_custom_call.1}
  #allocation0 [shape = 'u32[]', space=smem, size = 0x4, offset = 0x4, fixed_abs, tag = 'smem constant byte address 0x4 - core index']
  #allocation1 [shape = 'u32[144,128]{1,0:T(1,128)}', space=vmem, size = 0x12000, scoped, tag = 'internal scratch']
  %s0 = inlined_call_operand.hbm [shape: f32[16,32], index: 0, kind: input, shape index: {}]
  %s1 = inlined_call_operand.hbm [shape: f32[32,32], index: 1, kind: input, shape index: {}]
  %s2 = inlined_call_operand.hbm [shape: f32[2,1,32], index: 2, kind: output, shape index: {0}]
  %s3 = inlined_call_operand.hbm [shape: f32[2,1,32], index: 3, kind: output, shape index: {1}]
  %4 = xla_tuple %s2, %s3
  %s5 = sld [smem:[#allocation0]]
  $region57: #{tpu_custom_call.1} parent=0
    _
  %s7 = ssub.s32 1, %s5
  %s8 = scalar_select 0, %s7, %s5
  $region1: #{tpu_custom_call.1} parent=0
    #allocation2 [shape = 'u8[8192]{0}', space=vmem, size = 0x2000, scoped, tag = 'input window, operand 0']
    #allocation3 [shape = 's32[2]{0}', space=sflag, size = 0x8, scoped, tag = 'scoped memory for tpu_custom_call.1']
    #allocation4 [shape = 's32[2]{0}', space=sflag, size = 0x8, scoped, tag = 'scoped memory for tpu_custom_call.1']
    #allocation5 [shape = 'u8[16384]{0}', space=vmem, size = 0x4000, scoped, tag = 'input window, operand 1, single buffered']
    #allocation6 [shape = 's32[1]{0}', space=sflag, size = 0x4, scoped, tag = 'scoped memory for tpu_custom_call.1']
    #allocation7 [shape = 'u8[1024]{0}', space=vmem, size = 0x400, scoped, tag = 'output window, operand 0']
    #allocation8 [shape = 'u8[1024]{0}', space=vmem, size = 0x400, scoped, tag = 'output window, operand 1']
    #allocation9 [shape = 's32[2]{0}', space=sflag, size = 0x8, scoped, tag = 'scoped memory for tpu_custom_call.1']
    %9 = vsyncpa [#allocation3], 0
    %s10 = scalar_lea.sflag [#allocation3], 1
    %11 = vsyncpa %s10, 0
    %12 = vsyncpa [#allocation6], 0
    %13 = vsyncpa [#allocation4], 0
    %s14 = scalar_lea.sflag [#allocation4], 1
    %15 = vsyncpa %s14, 0
    %16 = vsyncpa [#allocation9], 0
    %s17 = scalar_lea.sflag [#allocation9], 1
    %18 = vsyncpa %s17, 0
    loop: start=0, step=1, limit=4
    $region2: #{tpu_custom_call.1} parent=1 // loop_pre_header
      _
    $region3: #{tpu_custom_call.1} parent=1 // loop_header
      %s20 = sphi 0, %s24
      %p21 = scmp.ge.s32.totalorder %s20, 4
      %s30 = sphi 0, %s32
      %s33 = sphi 0, %s30
      %s34 = sphi 0, %s33
      %s50 = sphi 0, %s34
      %s54 = sphi 0, %s54
      %s56 = sphi 0, %s54
      %s57 = sphi 0, %s56
      %s71 = sphi 0, %s57
      %s77 = sphi 0, %s79
      %s80 = sphi 0, %s77
      %s81 = sphi 0, %s80
      %s97 = sphi 0, %s81
      %s103 = sphi 0, %s105
      %s106 = sphi 0, %s103
      %s107 = sphi 0, %s106
      %s123 = sphi 0, %s107
    $region4: #{tpu_custom_call.1} parent=1 // loop_header_branch
      %23 = sbr.rel (%p21) target = $region8
    $region5: #{tpu_custom_call.1} parent=1 // loop_body
      %s25 = ssub.s32 %s20, 1
      %s26 = ssub.s32 %s20, 2
      %s27 = sadd.s32 %s20, 1
      %s28 = ssub.s32 %s20, %s27
      %p29 = scmp.eq.s32.totalorder %s28, 0
      %s31 = sadd.s32 %s30, 1
      %s32 = scalar_select %p29, %s30, %s31
      %p35 = pneg %p29
      %p36 = scmp.eq.s32.totalorder %s20, 1
      %p37 = por %p35, %p36
      %p38 = scmp.ne.s32.totalorder %s30, %s33
      %p39 = scmp.eq.s32.totalorder %s20, 0
      %p40 = por %p38, %p39
      %p41 = scmp.ne.s32.totalorder %s30, %s33
      %p42 = scmp.eq.s32.totalorder %s25, 1
      %p43 = por %p41, %p42
      %p44 = scmp.ne.s32.totalorder %s33, %s34
      %p45 = scmp.eq.s32.totalorder %s25, 0
      %p46 = por %p44, %p45
      %p47 = scmp.ne.s32.totalorder %s33, %s34
      %p48 = scmp.eq.s32.totalorder %s26, 1
      %p49 = por %p47, %p48
      %p51 = scmp.ne.s32.totalorder %s34, %s50
      %p52 = scmp.eq.s32.totalorder %s26, 0
      %p53 = por %p51, %p52
      %s55 = sadd.s32 %s54, 1
      %p58 = scmp.eq.s32.totalorder %s20, 1
      %p59 = scmp.ne.s32.totalorder %s54, %s56
      %p60 = scmp.eq.s32.totalorder %s20, 0
      %p61 = por %p59, %p60
      %p62 = scmp.ne.s32.totalorder %s54, %s56
      %p63 = scmp.eq.s32.totalorder %s25, 1
      %p64 = por %p62, %p63
      %p65 = scmp.ne.s32.totalorder %s56, %s57
      %p66 = scmp.eq.s32.totalorder %s25, 0
      %p67 = por %p65, %p66
      %p68 = scmp.ne.s32.totalorder %s56, %s57
      %p69 = scmp.eq.s32.totalorder %s26, 1
      %p70 = por %p68, %p69
      %p72 = scmp.ne.s32.totalorder %s57, %s71
      %p73 = scmp.eq.s32.totalorder %s26, 0
      %p74 = por %p72, %p73
      %s75 = ssub.s32 %s20, %s27
      %p76 = scmp.eq.s32.totalorder %s75, 0
      %s78 = sadd.s32 %s77, 1
      %s79 = scalar_select %p76, %s77, %s78
      %p82 = pneg %p76
      %p83 = scmp.eq.s32.totalorder %s20, 1
      %p84 = por %p82, %p83
      %p85 = scmp.ne.s32.totalorder %s77, %s80
      %p86 = scmp.eq.s32.totalorder %s20, 0
      %p87 = por %p85, %p86
      %p88 = scmp.ne.s32.totalorder %s77, %s80
      %p89 = scmp.eq.s32.totalorder %s25, 1
      %p90 = por %p88, %p89
      %p91 = scmp.ne.s32.totalorder %s80, %s81
      %p92 = scmp.eq.s32.totalorder %s25, 0
      %p93 = por %p91, %p92
      %p94 = scmp.ne.s32.totalorder %s80, %s81
      %p95 = scmp.eq.s32.totalorder %s26, 1
      %p96 = por %p94, %p95
      %p98 = scmp.ne.s32.totalorder %s81, %s97
      %p99 = scmp.eq.s32.totalorder %s26, 0
      %p100 = por %p98, %p99
      %s101 = ssub.s32 %s20, %s27
      %p102 = scmp.eq.s32.totalorder %s101, 0
      %s104 = sadd.s32 %s103, 1
      %s105 = scalar_select %p102, %s103, %s104
      %p108 = pneg %p102
      %p109 = scmp.eq.s32.totalorder %s20, 1
      %p110 = por %p108, %p109
      %p111 = scmp.ne.s32.totalorder %s103, %s106
      %p112 = scmp.eq.s32.totalorder %s20, 0
      %p113 = por %p111, %p112
      %p114 = scmp.ne.s32.totalorder %s103, %s106
      %p115 = scmp.eq.s32.totalorder %s25, 1
      %p116 = por %p114, %p115
      %p117 = scmp.ne.s32.totalorder %s106, %s107
      %p118 = scmp.eq.s32.totalorder %s25, 0
      %p119 = por %p117, %p118
      %p120 = scmp.ne.s32.totalorder %s106, %s107
      %p121 = scmp.eq.s32.totalorder %s26, 1
      %p122 = por %p120, %p121
      %p124 = scmp.ne.s32.totalorder %s107, %s123
      %p125 = scmp.eq.s32.totalorder %s26, 0
      %p126 = por %p124, %p125
      %p127 = scmp.le.s32.totalorder 1, %s20
      %p128 = scmp.lt.s32.totalorder %s20, 3
      %p129 = pnand %p127, %p128
      %p130 = pneg %p129
      // Predicated region
      $region9: #{tpu_custom_call.1} parent=5 // pred_check
        _
      $region10: #{tpu_custom_call.1} parent=5 // pred_check_branch
        %132 = sbr.rel (%p129) target = $region12
      $region11: #{tpu_custom_call.1} parent=5 // pred_region
        %s133 = ssub.s32 %s20, 1
        // Predicated region
        $region13: #{tpu_custom_call.1} parent=11 // pred_check
          %p134 = pneg %p67
        $region14: #{tpu_custom_call.1} parent=11 // pred_check_branch
          %136 = sbr.rel (%p134) target = $region16
        $region15: #{tpu_custom_call.1} parent=11 // pred_region
          %s138 = ssub.s32 512, 512
          %139 = vsyncadd [#allocation6], %s138
          %s140 = sshll.u32 [#allocation5], 4
          %s141 = int_to_ptr.vmem [resolvable:$true] %s140
          %146 = dma.hbm_to_vmem [thread:$0]  %s1, 512, %s141, [#allocation6], 128, 128, 8
        $region16: #{tpu_custom_call.1} parent=11 // pred_fallthru
          _
      $region12: #{tpu_custom_call.1} parent=5 // pred_fallthru
        _
      %p147 = scmp.lt.s32.totalorder %s20, 2
      // Predicated region
      $region17: #{tpu_custom_call.1} parent=5 // pred_check
        %p148 = pneg %p147
      $region18: #{tpu_custom_call.1} parent=5 // pred_check_branch
        %150 = sbr.rel (%p148) target = $region20
      $region19: #{tpu_custom_call.1} parent=5 // pred_region
        // Predicated region
        $region21: #{tpu_custom_call.1} parent=19 // pred_check
          %p151 = pneg %p40
        $region22: #{tpu_custom_call.1} parent=19 // pred_check_branch
          %153 = sbr.rel (%p151) target = $region24
        $region23: #{tpu_custom_call.1} parent=19 // pred_region
          %s154 = sand.u32 %s30, 1
          %s155 = scalar_lea.sflag [#allocation3], %s154
          %s156 = sand.u32 %s30, 1
          %s157 = smul.addr %s156, 8
          %s158 = scalar_lea.vmem [#allocation2], %s157
          %s160 = ssub.s32 128, 128
          %161 = vsyncadd %s155, %s160
          %s162 = smul.addr %s20, 128
          %s163 = scalar_lea.hbm %s0, %s162
          %s165 = sshll.u32 %s158, 4
          %s166 = int_to_ptr.vmem [resolvable:$true] %s165
          %168 = dma.hbm_to_vmem [thread:$0]  %s163, 128, %s166, %s155
        $region24: #{tpu_custom_call.1} parent=19 // pred_fallthru
          _
      $region20: #{tpu_custom_call.1} parent=5 // pred_fallthru
        _
      %p169 = scmp.le.s32.totalorder 1, %s20
      %p170 = scmp.lt.s32.totalorder %s20, 3
      %p171 = pnand %p169, %p170
      %p172 = pneg %p171
      // Predicated region
      $region25: #{tpu_custom_call.1} parent=5 // pred_check
        _
      $region26: #{tpu_custom_call.1} parent=5 // pred_check_branch
        %174 = sbr.rel (%p171) target = $region28
      $region27: #{tpu_custom_call.1} parent=5 // pred_region
        %s175 = ssub.s32 %s20, 1
        %s176 = sand.u32 %s33, 1
        %s177 = scalar_lea.sflag [#allocation3], %s176
        %s178 = sand.u32 %s33, 1
        %s179 = smul.addr %s178, 8
        %s180 = scalar_lea.vmem [#allocation2], %s179
        // Predicated region
        $region29: #{tpu_custom_call.1} parent=27 // pred_check
          %p181 = pneg %p46
        $region30: #{tpu_custom_call.1} parent=27 // pred_check_branch
          %183 = sbr.rel (%p181) target = $region32
        $region31: #{tpu_custom_call.1} parent=27 // pred_region
          %184 = dma.done %s177, 128
        $region32: #{tpu_custom_call.1} parent=27 // pred_fallthru
          _
        // Predicated region
        $region33: #{tpu_custom_call.1} parent=27 // pred_check
          %p185 = pneg %p67
        $region34: #{tpu_custom_call.1} parent=27 // pred_check_branch
          %187 = sbr.rel (%p185) target = $region36
        $region35: #{tpu_custom_call.1} parent=27 // pred_region
          %188 = dma.done [#allocation6], 512
        $region36: #{tpu_custom_call.1} parent=27 // pred_fallthru
          _
        %s189 = sand.u32 %s33, 1
        %s190 = scalar_lea.sflag [#allocation3], %s189
        %s191 = sand.u32 %s33, 1
        %s192 = smul.addr %s191, 8
        %s193 = scalar_lea.vmem [#allocation2], %s192
        %p194 = pneg %p46
        %p195 = pneg %p43
        %p196 = pneg %p67
        %p197 = pneg %p64
        %p198 = pneg %p93
        %p199 = pneg %p90
        %s200 = sand.u32 %s80, 1
        %s201 = scalar_lea.sflag [#allocation4], %s200
        %s202 = sand.u32 %s80, 1
        %s203 = scalar_lea.vmem [#allocation7], %s202
        %p204 = pneg %p119
        %p205 = pneg %p116
        %s206 = sand.u32 %s106, 1
        %s207 = scalar_lea.sflag [#allocation9], %s206
        %s208 = sand.u32 %s106, 1
        %s209 = scalar_lea.vmem [#allocation8], %s208
        %v210 = vld [vmem:[%s180] sm:$0xff]
        %v211 = vld [vmem:[#allocation5] sm:$0xff]
        %v212 = vld [vmem:[#allocation5 + $0x8] sm:$0xff]
        %v213 = vld [vmem:[#allocation5 + $0x10] sm:$0xff]
        %v214 = vld [vmem:[#allocation5 + $0x18] sm:$0xff]
        %vm215 = vcmask 261120
        %v217 = vsel %vm215, %v210, 0
        %219 = vmatprep.subr.mxu0 0.0
        %220 = vmatpush1.msra.mxu0 %v211
        %221 = vmatprep.subr.mxu0 0.0
        %222 = vmatpush1.msra.mxu0 %v212
        %223 = vmatprep.subr.mxu0 0.0
        %224 = vmatpush1.msra.mxu0 %v213
        %225 = vmatprep.subr.mxu0 0.0
        %226 = vmatpush1.msra.mxu0 %v214
        %227 = vmatprep.subr.mxu0 0.0
        %228 = vmatpush1.msra.mxu0 0.0
        %229 = vmatprep.subr.mxu0 0.0
        %230 = vmatpush1.msra.mxu0 0.0
        %231 = vmatprep.subr.mxu0 0.0
        %232 = vmatpush1.msra.mxu0 0.0
        %233 = vmatprep.subr.mxu0 0.0
        %234 = vmatpush1.msra.mxu0 0.0
        %235 = vmatprep.subr.mxu0 0.0
        %236 = vmatpush1.msra.mxu0 0.0
        %237 = vmatprep.subr.mxu0 0.0
        %238 = vmatpush1.msra.mxu0 0.0
        %239 = vmatprep.subr.mxu0 0.0
        %240 = vmatpush1.msra.mxu0 0.0
        %241 = vmatprep.subr.mxu0 0.0
        %242 = vmatpush1.msra.mxu0 0.0
        %243 = vmatprep.subr.mxu0 0.0
        %244 = vmatpush1.msra.mxu0 0.0
        %245 = vmatprep.subr.mxu0 0.0
        %246 = vmatpush1.msra.mxu0 0.0
        %247 = vmatprep.subr.mxu0 0.0
        %248 = vmatpush1.msra.mxu0 0.0
        %249 = vmatprep.subr.mxu0 0.0
        %250 = vmatpush1.msra.mxu0 0.0
        %251 = vmatprep.subr.mxu0 0.0
        %252 = vmatpush1.msra.mxu0 0.0
        %253 = vmatprep.subr.mxu0 0.0
        %254 = vmatpush1.msra.mxu0 0.0
        %255 = vmatprep.subr.mxu0 0.0
        %256 = vmatpush1.msra.mxu0 0.0
        %257 = vmatprep.subr.mxu0 0.0
        %258 = vmatpush1.msra.mxu0 0.0
        %259 = vmatprep.subr.mxu0 0.0
        %260 = vmatpush1.msra.mxu0 0.0
        %261 = vmatprep.subr.mxu0 0.0
        %262 = vmatpush1.msra.mxu0 0.0
        %263 = vmatprep.subr.mxu0 0.0
        %264 = vmatpush1.msra.mxu0 0.0
        %265 = vmatprep.subr.mxu0 0.0
        %266 = vmatpush1.msra.mxu0 0.0
        %267 = vmatprep.subr.mxu0 0.0
        %268 = vmatpush1.msra.mxu0 0.0
        %269 = vmatprep.subr.mxu0 0.0
        %270 = vmatpush1.msra.mxu0 0.0
        %271 = vmatprep.subr.mxu0 0.0
        %272 = vmatpush1.msra.mxu0 0.0
        %273 = vmatprep.subr.mxu0 0.0
        %274 = vmatpush1.msra.mxu0 0.0
        %275 = vmatprep.subr.mxu0 0.0
        %276 = vmatpush1.msra.mxu0 0.0
        %277 = vmatprep.subr.mxu0 0.0
        %278 = vmatpush1.msra.mxu0 0.0
        %279 = vmatprep.subr.mxu0 0.0
        %280 = vmatpush1.msra.mxu0 0.0
        %281 = vmatprep.subr.mxu0 0.0
        %282 = vmatpush1.msra.mxu0 0.0
        %283 = vmatprep.mubr.f32.mxu0 0.0
        %284 = vmatmul.mubr.f32.gmra.mrb[0].mxu0 %v217
        %v285 = vpop.f32.mrb[0].mxu0
        %v286 = vadd.f32 0.0, %v285
        %v287 = vpop.f32.mrb[0].mxu0
        %288 = vdwg.mxu0
        %v289 = vsel %vm215, %v286, 0.0
        %v290 = vrot.slane %v289, 4
        %v291 = vadd.f32 %v289, %v290
        %v292 = vrot.slane %v291, 2
        %v293 = vadd.f32 %v291, %v292
        %v294 = vrot.slane %v293, 1
        %v295 = vadd.f32 %v293, %v294
        %vm296 = vcmask 253952
        %297 = vst.msk [vmem:[%s203] sm:$0x1] %vm296, %v295
        %v298 = vmul.f32 %v286, %v286
        %v299 = vsel %vm215, %v298, 0.0
        %v300 = vrot.slane %v299, 4
        %v301 = vadd.f32 %v299, %v300
        %v302 = vrot.slane %v301, 2
        %v303 = vadd.f32 %v301, %v302
        %v304 = vrot.slane %v303, 1
        %v305 = vadd.f32 %v303, %v304
        %306 = vst.msk [vmem:[%s209] sm:$0x1] %vm296, %v305
        %s307 = sand.u32 %s80, 1
        %s308 = scalar_lea.sflag [#allocation4], %s307
        %s309 = sand.u32 %s80, 1
        %s310 = scalar_lea.vmem [#allocation7], %s309
        %s311 = sand.u32 %s106, 1
        %s312 = scalar_lea.sflag [#allocation9], %s311
        %s313 = sand.u32 %s106, 1
        %s314 = scalar_lea.vmem [#allocation8], %s313
        // Predicated region
        $region37: #{tpu_custom_call.1} parent=27 // pred_check
          %p315 = pneg %p90
        $region38: #{tpu_custom_call.1} parent=27 // pred_check_branch
          %317 = sbr.rel (%p315) target = $region40
        $region39: #{tpu_custom_call.1} parent=27 // pred_region
          %s319 = ssub.s32 16, 16
          %320 = vsyncadd %s308, %s319
          %s321 = smul.addr %s25, 16
          %s322 = scalar_lea.hbm %s2, %s321
          %s324 = sshll.u32 %s310, 4
          %s325 = int_to_ptr.vmem [resolvable:$true] %s324
          %327 = dma.vmem_to_hbm [thread:$0]  %s325, 16, %s322, %s308
        $region40: #{tpu_custom_call.1} parent=27 // pred_fallthru
          _
        // Predicated region
        $region41: #{tpu_custom_call.1} parent=27 // pred_check
          %p328 = pneg %p116
        $region42: #{tpu_custom_call.1} parent=27 // pred_check_branch
          %330 = sbr.rel (%p328) target = $region44
        $region43: #{tpu_custom_call.1} parent=27 // pred_region
          %s332 = ssub.s32 16, 16
          %333 = vsyncadd %s312, %s332
          %s334 = smul.addr %s25, 16
          %s335 = scalar_lea.hbm %s3, %s334
          %s337 = sshll.u32 %s314, 4
          %s338 = int_to_ptr.vmem [resolvable:$true] %s337
          %340 = dma.vmem_to_hbm [thread:$0]  %s338, 16, %s335, %s312
        $region44: #{tpu_custom_call.1} parent=27 // pred_fallthru
          _
      $region28: #{tpu_custom_call.1} parent=5 // pred_fallthru
        _
      %p341 = scmp.le.s32.totalorder 2, %s20
      // Predicated region
      $region45: #{tpu_custom_call.1} parent=5 // pred_check
        %p342 = pneg %p341
      $region46: #{tpu_custom_call.1} parent=5 // pred_check_branch
        %344 = sbr.rel (%p342) target = $region48
      $region47: #{tpu_custom_call.1} parent=5 // pred_region
        %s345 = ssub.s32 %s20, 2
        // Predicated region
        $region49: #{tpu_custom_call.1} parent=47 // pred_check
          %p346 = pneg %p96
        $region50: #{tpu_custom_call.1} parent=47 // pred_check_branch
          %348 = sbr.rel (%p346) target = $region52
        $region51: #{tpu_custom_call.1} parent=47 // pred_region
          %s349 = sand.u32 %s81, 1
          %s350 = scalar_lea.sflag [#allocation4], %s349
          %s351 = sand.u32 %s81, 1
          %s352 = scalar_lea.vmem [#allocation7], %s351
          %353 = dma.done %s350, 16
        $region52: #{tpu_custom_call.1} parent=47 // pred_fallthru
          _
        // Predicated region
        $region53: #{tpu_custom_call.1} parent=47 // pred_check
          %p354 = pneg %p122
        $region54: #{tpu_custom_call.1} parent=47 // pred_check_branch
          %356 = sbr.rel (%p354) target = $region56
        $region55: #{tpu_custom_call.1} parent=47 // pred_region
          %s357 = sand.u32 %s107, 1
          %s358 = scalar_lea.sflag [#allocation9], %s357
          %s359 = sand.u32 %s107, 1
          %s360 = scalar_lea.vmem [#allocation8], %s359
          %361 = dma.done %s358, 16
        $region56: #{tpu_custom_call.1} parent=47 // pred_fallthru
          _
      $region48: #{tpu_custom_call.1} parent=5 // pred_fallthru
        _
    $region6: #{tpu_custom_call.1} parent=1 // loop_footer
      %s24 = sadd.s32 1, %s20
    $region7: #{tpu_custom_call.1} parent=1 // loop_footer_branch
      %19 = sbr.rel target = $region3
    $region8: #{tpu_custom_call.1} parent=1 // loop_exit
      _
    %362 = vsyncpa [#allocation3], 1
    %s363 = scalar_lea.sflag [#allocation3], 1
    %364 = vsyncpa %s363, 1
    %365 = vsyncpa [#allocation6], 1
    %366 = vsyncpa [#allocation4], 1
    %s367 = scalar_lea.sflag [#allocation4], 1
    %368 = vsyncpa %s367, 1
    %369 = vsyncpa [#allocation9], 1
    %s370 = scalar_lea.sflag [#allocation9], 1
    %371 = vsyncpa %s370, 1

</llo_original>
